<compile_context>
chip_gen: v7x
topology: tpu7x:2x2x1
jax: 0.10.0
libtpu: 0.0.40
codegen_flags: <defaults>
</compile_context>

<pallas_src>
import functools

import jax
import jax.numpy as jnp
from jax import lax
from jax.experimental import pallas as pl
from jax.experimental.pallas import tpu as pltpu

_LANES = 128
_MAX_ROWS = 2048          # 2048 x 128 x 4B = 1 MiB per f32 stream per block


def _cdiv(a, b):
    return -(-a // b)


def _round_up(a, b):
    return _cdiv(a, b) * b


def _num_tensorcores():
    """2 on dual-TensorCore chips (v7x), 1 otherwise (v5e / v6e / unknown)."""
    try:
        kind = jax.devices()[0].device_kind.lower()
    except Exception:
        return 1
    return 2 if ("v7" in kind or "7x" in kind) else 1


_NCORES = _num_tensorcores()


def _loss_f32(x, y):
    """Elementwise weighted-BCE loss in f32 (bf16/int inputs upcast in-register)."""
    x = x.astype(jnp.float32)
    y = y.astype(jnp.float32)
    s = jax.nn.softplus(-x)                      # stable; finite for all x
    # (1 + 4y)*s + (1 - y)*x  ==  s + x + y*(4*s - x)   (one fewer VALU mul)
    return s + x + y * (4.0 * s - x)


def _wbce_mean_kernel(x_ref, y_ref, out_ref, *, nk, tr, full_rows, rem):
    """Accumulates per-core partial sums into a resident (1, 8, 128) output block."""
    p = pl.program_id(0)
    k = pl.program_id(1)

    @pl.when(k == 0)
    def _init():
        out_ref[...] = jnp.zeros_like(out_ref)

    # Row index of this block in the flattened (rows, 128) view.  Row-based
    # comparisons stay well inside int32 even for multi-billion-element inputs.
    block_row = (p * nk + k) * tr

    def _accumulate(vals):
        # (tr,128) -> (1, tr//8, 8, 128); sum over axis 1 is pure vreg VPU adds.
        out_ref[...] += jnp.sum(vals.reshape(1, tr // 8, 8, _LANES), axis=1)

    interior = block_row + tr <= full_rows

    # Fast path: every row of this block is fully valid -> no masking work at all.
    @pl.when(interior)
    def _fast():
        _accumulate(_loss_f32(x_ref[...], y_ref[...]))

    # Boundary / clamped block: select-away rows/lanes past the valid n elements
    # (also discards garbage from Pallas' partially-OOB boundary reads; select, not
    # multiply-by-mask, so NaN/Inf garbage cannot leak in).
    @pl.when(jnp.logical_not(interior))
    def _masked():
        grow = block_row + lax.broadcasted_iota(jnp.int32, (tr, _LANES), 0)
        lidx = lax.broadcasted_iota(jnp.int32, (tr, _LANES), 1)
        valid = (grow < full_rows) | ((grow == full_rows) & (lidx < rem))
        _accumulate(jnp.where(valid, _loss_f32(x_ref[...], y_ref[...]), 0.0))


def _wbce_none_kernel(x_ref, y_ref, o_ref):
    o_ref[...] = _loss_f32(x_ref[...], y_ref[...]).astype(o_ref.dtype)


def _plan(rows, ncores):
    """(ncores, nk, tr): grid (ncores, nk) of (tr, 128) blocks covering `rows` rows."""
    if ncores > 1 and rows < 4 * ncores * 8:
        ncores = 1                         # tiny input: core split buys nothing
    per_core = _cdiv(rows, ncores)
    nk = max(1, _cdiv(per_core, _MAX_ROWS))    # grid steps per core (chosen first)
    tr = _round_up(_cdiv(per_core, nk), 8)     # rows per block (near-zero over-read)
    return ncores, nk, tr


def _row_spec(tr, nk, last_block):
    # Clamp so no grid slot ever indexes a block fully outside the array; clamped
    # slots re-read the last valid block (mean: masked to 0; none: idempotent rewrite).
    return pl.BlockSpec(
        (tr, _LANES), lambda p, k: (jnp.minimum(p * nk + k, last_block), 0))


def _as_slab(a, rows):
    """Flatten to (rows, 128).  Zero-pads (<=127 elems) only when n % 128 != 0."""
    flat = a.reshape(-1)
    need = rows * _LANES
    if flat.shape[0] != need:
        flat = jnp.pad(flat, (0, need - flat.shape[0]))
    return flat.reshape(rows, _LANES)


@functools.partial(jax.jit, static_argnames=("reduction",))
def weighted_bce_with_logits_loss(x, y, reduction="mean"):
    """loss = -(5*y*logsigmoid(x) + (1-y)*log(1-sigmoid(x))); reduction in {'mean','none'}.

    x / y may be f32, bf16 or integer-typed; the kernel upcasts in-register (no
    wrapper-side casts), so narrow caller dtypes directly halve HBM traffic.
    """
    if reduction not in ("mean", "none"):
        raise NotImplementedError(reduction)

    orig_shape = x.shape
    n = x.size                                     # static under jit
    if n == 0:                                     # torch: mean over empty -> NaN
        if reduction == "mean":
            return jnp.float32(jnp.nan)
        return jnp.zeros(orig_shape, x.dtype)

    rows = _cdiv(n, _LANES)                        # rows of the (rows, 128) slab view
    ncores, nk, tr = _plan(rows, _NCORES)
    last_block = _cdiv(rows, tr) - 1

    x2 = _as_slab(x, rows)
    y2 = _as_slab(y, rows)
    in_specs = [_row_spec(tr, nk, last_block), _row_spec(tr, nk, last_block)]

    core_sem = pltpu.CORE_PARALLEL if ncores > 1 else "arbitrary"
    in_bytes = n * (x.dtype.itemsize + y.dtype.itemsize)

    if reduction == "mean":
        full_rows, rem = divmod(n, _LANES)
        kernel = functools.partial(_wbce_mean_kernel, nk=nk, tr=tr,
                                   full_rows=full_rows, rem=rem)
        partials = pl.pallas_call(
            kernel,
            out_shape=jax.ShapeDtypeStruct((ncores, 8, _LANES), jnp.float32),
            grid_spec=pltpu.PrefetchScalarGridSpec(
                num_scalar_prefetch=0,
                grid=(ncores, nk),
                in_specs=in_specs,
                out_specs=pl.BlockSpec((1, 8, _LANES), lambda p, k: (p, 0, 0)),
            ),
            compiler_params=pltpu.CompilerParams(
                dimension_semantics=(core_sem, "arbitrary")),
            cost_estimate=pl.CostEstimate(
                flops=10 * n, transcendentals=2 * n,
                bytes_accessed=in_bytes + 4 * ncores * 8 * _LANES),
        )(x2, y2)
        # Tiny final reduce of ncores*8*128 partials + the mean division.
        return jnp.sum(partials) / jnp.float32(n)

    else:  # reduction == "none"
        out = pl.pallas_call(
            _wbce_none_kernel,
            out_shape=jax.ShapeDtypeStruct((rows, _LANES), x.dtype),
            grid_spec=pltpu.PrefetchScalarGridSpec(
                num_scalar_prefetch=0,
                grid=(ncores, nk),
                in_specs=in_specs,
                out_specs=_row_spec(tr, nk, last_block),
            ),
            compiler_params=pltpu.CompilerParams(
                dimension_semantics=(core_sem, "arbitrary")),
            cost_estimate=pl.CostEstimate(
                flops=10 * n, transcendentals=2 * n,
                bytes_accessed=in_bytes + n * x.dtype.itemsize),
        )(x2, y2)
        if rows * _LANES == n:
            return out.reshape(orig_shape)         # aligned: pure reshape, no copy
        # Ragged tail: one slice to drop the <=127 padded elements.
        return out.reshape(-1)[:n].reshape(orig_shape)


def _reference(x, y, reduction="mean"):
    # Mirrors the PyTorch module literally (logsigmoid + log(1 - sigmoid)).
    loss = -(5.0 * y * jax.nn.log_sigmoid(x)
             + (1.0 - y) * jnp.log(1.0 - jax.nn.sigmoid(x)))
    if reduction == "mean":
        return jnp.mean(loss)
    return loss


if __name__ == "__main__":
    key = jax.random.PRNGKey(0)

    def _check(shape):
        kx, ky = jax.random.split(jax.random.fold_in(key, sum(shape)))
        x = jax.random.normal(kx, shape, dtype=jnp.float32) * 2.0
        y = (jax.random.uniform(ky, shape) > 0.5).astype(jnp.float32)

        out_mean = jax.block_until_ready(
            weighted_bce_with_logits_loss(x, y, reduction="mean"))
        out_none = jax.block_until_ready(
            weighted_bce_with_logits_loss(x, y, reduction="none"))

        ref_mean = _reference(x, y, "mean")
        ref_none = _reference(x, y, "none")

        assert out_none.shape == x.shape
        # Reference uses the numerically unstable log(1 - sigmoid(x)) form, so
        # allow a slightly looser tolerance than pure f32 round-off.
        assert jnp.allclose(out_mean, ref_mean, rtol=1e-4, atol=1e-4)
        assert jnp.allclose(out_none, ref_none, rtol=1e-4, atol=1e-4)

    _check((2, 4, 16, 16))   # lane-aligned (n = 2048): zero-copy, fast interior path
    _check((3, 5, 7, 11))    # ragged (n = 1155): boundary block + in-kernel mask

    print("KERNEL_OK")
</pallas_src>

<mosaic_0001>
module attributes {stable_mosaic.version = 11 : i64} {
  func.func @_wbce_mean_kernel(%arg0: i32, %arg1: i32, %arg2: memref<16x128xf32, #tpu.memory_space<vmem>>, %arg3: memref<16x128xf32, #tpu.memory_space<vmem>>, %arg4: memref<1x8x128xf32, #tpu.memory_space<vmem>>) attributes {dimension_semantics = [#tpu.dimension_semantics<arbitrary>, #tpu.dimension_semantics<arbitrary>], iteration_bounds = array<i64: 1, 1>, scalar_prefetch = 0 : i64, scratch_operands = 0 : i64, tpu.core_type = #tpu.core_type<tc>, window_params = [{transform_indices = @transform_0, window_bounds = array<i64: 16, 128>}, {transform_indices = @transform_1, window_bounds = array<i64: 16, 128>}, {transform_indices = @transform_2, window_bounds = array<i64: 1, 8, 128>}]} {
    %c0_i32 = arith.constant 0 : i32
    %0 = arith.cmpi eq, %arg1, %c0_i32 : i32
    %1 = arith.extui %0 : i1 to i32
    %c0_i32_0 = arith.constant 0 : i32
    %2 = arith.cmpi ne, %1, %c0_i32_0 : i32
    scf.if %2 {
      %cst = arith.constant 0.000000e+00 : f32
      %13 = vector.broadcast %cst : f32 to vector<1x8x128xf32>
      %c0 = arith.constant 0 : index
      %c0_5 = arith.constant 0 : index
      %c0_6 = arith.constant 0 : index
      %14 = vector.load %arg4[%c0, %c0_5, %c0_6] : memref<1x8x128xf32, #tpu.memory_space<vmem>>, vector<1x8x128xf32>
      tpu.vector_store %arg4[%c0, %c0_5, %c0_6], %13 {strides = array<i32>} : memref<1x8x128xf32, #tpu.memory_space<vmem>>, vector<1x8x128xf32>,
    } else {
    }
    %c1_i32 = arith.constant 1 : i32
    %3 = arith.muli %arg0, %c1_i32 : i32
    %4 = arith.addi %3, %arg1 : i32
    %c16_i32 = arith.constant 16 : i32
    %5 = arith.muli %4, %c16_i32 : i32
    %c16_i32_1 = arith.constant 16 : i32
    %6 = arith.addi %5, %c16_i32_1 : i32
    %c16_i32_2 = arith.constant 16 : i32
    %7 = arith.cmpi sle, %6, %c16_i32_2 : i32
    %8 = arith.extui %7 : i1 to i32
    %c0_i32_3 = arith.constant 0 : i32
    %9 = arith.cmpi ne, %8, %c0_i32_3 : i32
    scf.if %9 {
      %c0 = arith.constant 0 : index
      %c0_5 = arith.constant 0 : index
      %13 = vector.load %arg2[%c0, %c0_5] : memref<16x128xf32, #tpu.memory_space<vmem>>, vector<16x128xf32>
      %c0_6 = arith.constant 0 : index
      %c0_7 = arith.constant 0 : index
      %14 = vector.load %arg3[%c0_6, %c0_7] : memref<16x128xf32, #tpu.memory_space<vmem>>, vector<16x128xf32>
      %cst = arith.constant 0.000000e+00 : f32
      %15 = vector.broadcast %cst : f32 to vector<16x128xf32>
      %16 = arith.subf %15, %13 : vector<16x128xf32>
      %cst_8 = arith.constant 0.000000e+00 : f32
      %17 = vector.broadcast %cst_8 : f32 to vector<16x128xf32>
      %18 = arith.maximumf %16, %17 : vector<16x128xf32>
      %19 = vector.broadcast %cst_8 : f32 to vector<16x128xf32>
      %20 = arith.subf %16, %19 : vector<16x128xf32>
      %21 = arith.cmpf one, %20, %20 : vector<16x128xf32>
      %22 = vector.broadcast %cst_8 : f32 to vector<16x128xf32>
      %23 = arith.addf %16, %22 : vector<16x128xf32>
      %24 = math.absf %20 : vector<16x128xf32>
      %cst_9 = arith.constant 0.000000e+00 : f32
      %25 = vector.broadcast %cst_9 : f32 to vector<16x128xf32>
      %26 = arith.subf %25, %24 : vector<16x128xf32>
      %27 = math.exp %26 : vector<16x128xf32>
      %28 = math.log1p %27 : vector<16x128xf32>
      %29 = arith.addf %18, %28 : vector<16x128xf32>
      %30 = arith.select %21, %23, %29 : vector<16x128xi1>, vector<16x128xf32>
      %31 = arith.addf %30, %13 : vector<16x128xf32>
      %cst_10 = arith.constant 4.000000e+00 : f32
      %32 = vector.broadcast %cst_10 : f32 to vector<16x128xf32>
      %33 = arith.mulf %32, %30 : vector<16x128xf32>
      %34 = arith.subf %33, %13 : vector<16x128xf32>
      %35 = arith.mulf %14, %34 : vector<16x128xf32>
      %36 = arith.addf %31, %35 : vector<16x128xf32>
      %c0_11 = arith.constant 0 : index
      %c0_12 = arith.constant 0 : index
      %c0_13 = arith.constant 0 : index
      %37 = vector.load %arg4[%c0_11, %c0_12, %c0_13] : memref<1x8x128xf32, #tpu.memory_space<vmem>>, vector<1x8x128xf32>
      %38 = vector.shape_cast %36 : vector<16x128xf32> to vector<1x2x8x128xf32>
      %cst_14 = arith.constant dense<0.000000e+00> : vector<1x8x128xf32>
      %39 = vector.multi_reduction <add>, %38, %cst_14 [1] : vector<1x2x8x128xf32> to vector<1x8x128xf32>
      %40 = arith.addf %37, %39 : vector<1x8x128xf32>
      %c0_15 = arith.constant 0 : index
      %c0_16 = arith.constant 0 : index
      %c0_17 = arith.constant 0 : index
      %41 = vector.load %arg4[%c0_15, %c0_16, %c0_17] : memref<1x8x128xf32, #tpu.memory_space<vmem>>, vector<1x8x128xf32>
      tpu.vector_store %arg4[%c0_15, %c0_16, %c0_17], %40 {strides = array<i32>} : memref<1x8x128xf32, #tpu.memory_space<vmem>>, vector<1x8x128xf32>,
    } else {
    }
    %true = arith.constant true
    %10 = arith.xori %7, %true : i1
    %11 = arith.extui %10 : i1 to i32
    %c0_i32_4 = arith.constant 0 : i32
    %12 = arith.cmpi ne, %11, %c0_i32_4 : i32
    scf.if %12 {
      %13 = tpu.iota {dimensions = array<i32: 0>} : vector<16x128xi32>
      %14 = vector.broadcast %5 : i32 to vector<16x128xi32>
      %15 = arith.addi %14, %13 : vector<16x128xi32>
      %16 = tpu.iota {dimensions = array<i32: 1>} : vector<16x128xi32>
      %c16_i32_5 = arith.constant 16 : i32
      %17 = vector.broadcast %c16_i32_5 : i32 to vector<16x128xi32>
      %18 = arith.cmpi slt, %15, %17 : vector<16x128xi32>
      %c16_i32_6 = arith.constant 16 : i32
      %19 = vector.broadcast %c16_i32_6 : i32 to vector<16x128xi32>
      %20 = arith.cmpi eq, %15, %19 : vector<16x128xi32>
      %c0_i32_7 = arith.constant 0 : i32
      %21 = vector.broadcast %c0_i32_7 : i32 to vector<16x128xi32>
      %22 = arith.cmpi slt, %16, %21 : vector<16x128xi32>
      %23 = arith.andi %20, %22 : vector<16x128xi1>
      %24 = arith.ori %18, %23 : vector<16x128xi1>
      %c0 = arith.constant 0 : index
      %c0_8 = arith.constant 0 : index
      %25 = vector.load %arg2[%c0, %c0_8] : memref<16x128xf32, #tpu.memory_space<vmem>>, vector<16x128xf32>
      %c0_9 = arith.constant 0 : index
      %c0_10 = arith.constant 0 : index
      %26 = vector.load %arg3[%c0_9, %c0_10] : memref<16x128xf32, #tpu.memory_space<vmem>>, vector<16x128xf32>
      %cst = arith.constant 0.000000e+00 : f32
      %27 = vector.broadcast %cst : f32 to vector<16x128xf32>
      %28 = arith.subf %27, %25 : vector<16x128xf32>
      %cst_11 = arith.constant 0.000000e+00 : f32
      %29 = vector.broadcast %cst_11 : f32 to vector<16x128xf32>
      %30 = arith.maximumf %28, %29 : vector<16x128xf32>
      %31 = vector.broadcast %cst_11 : f32 to vector<16x128xf32>
      %32 = arith.subf %28, %31 : vector<16x128xf32>
      %33 = arith.cmpf one, %32, %32 : vector<16x128xf32>
      %34 = vector.broadcast %cst_11 : f32 to vector<16x128xf32>
      %35 = arith.addf %28, %34 : vector<16x128xf32>
      %36 = math.absf %32 : vector<16x128xf32>
      %cst_12 = arith.constant 0.000000e+00 : f32
      %37 = vector.broadcast %cst_12 : f32 to vector<16x128xf32>
      %38 = arith.subf %37, %36 : vector<16x128xf32>
      %39 = math.exp %38 : vector<16x128xf32>
      %40 = math.log1p %39 : vector<16x128xf32>
      %41 = arith.addf %30, %40 : vector<16x128xf32>
      %42 = arith.select %33, %35, %41 : vector<16x128xi1>, vector<16x128xf32>
      %43 = arith.addf %42, %25 : vector<16x128xf32>
      %cst_13 = arith.constant 4.000000e+00 : f32
      %44 = vector.broadcast %cst_13 : f32 to vector<16x128xf32>
      %45 = arith.mulf %44, %42 : vector<16x128xf32>
      %46 = arith.subf %45, %25 : vector<16x128xf32>
      %47 = arith.mulf %26, %46 : vector<16x128xf32>
      %48 = arith.addf %43, %47 : vector<16x128xf32>
      %cst_14 = arith.constant 0.000000e+00 : f32
      %49 = vector.broadcast %cst_14 : f32 to vector<16x128xf32>
      %50 = arith.select %24, %48, %49 : vector<16x128xi1>, vector<16x128xf32>
      %c0_15 = arith.constant 0 : index
      %c0_16 = arith.constant 0 : index
      %c0_17 = arith.constant 0 : index
      %51 = vector.load %arg4[%c0_15, %c0_16, %c0_17] : memref<1x8x128xf32, #tpu.memory_space<vmem>>, vector<1x8x128xf32>
      %52 = vector.shape_cast %50 : vector<16x128xf32> to vector<1x2x8x128xf32>
      %cst_18 = arith.constant dense<0.000000e+00> : vector<1x8x128xf32>
      %53 = vector.multi_reduction <add>, %52, %cst_18 [1] : vector<1x2x8x128xf32> to vector<1x8x128xf32>
      %54 = arith.addf %51, %53 : vector<1x8x128xf32>
      %c0_19 = arith.constant 0 : index
      %c0_20 = arith.constant 0 : index
      %c0_21 = arith.constant 0 : index
      %55 = vector.load %arg4[%c0_19, %c0_20, %c0_21] : memref<1x8x128xf32, #tpu.memory_space<vmem>>, vector<1x8x128xf32>
      tpu.vector_store %arg4[%c0_19, %c0_20, %c0_21], %54 {strides = array<i32>} : memref<1x8x128xf32, #tpu.memory_space<vmem>>, vector<1x8x128xf32>,
    } else {
    }
    return
  }
  func.func @transform_0(%arg0: i32, %arg1: i32) -> (i32, i32) {
    %c1_i32 = arith.constant 1 : i32
    %0 = arith.muli %arg0, %c1_i32 : i32
    %1 = arith.addi %0, %arg1 : i32
    %c0_i32 = arith.constant 0 : i32
    %2 = arith.minsi %1, %c0_i32 : i32
    %c0_i32_0 = arith.constant 0 : i32
    %c0_i32_1 = arith.constant 0 : i32
    return %2, %c0_i32_0 : i32, i32
  }
  func.func @transform_1(%arg0: i32, %arg1: i32) -> (i32, i32) {
    %c1_i32 = arith.constant 1 : i32
    %0 = arith.muli %arg0, %c1_i32 : i32
    %1 = arith.addi %0, %arg1 : i32
    %c0_i32 = arith.constant 0 : i32
    %2 = arith.minsi %1, %c0_i32 : i32
    %c0_i32_0 = arith.constant 0 : i32
    %c0_i32_1 = arith.constant 0 : i32
    return %2, %c0_i32_0 : i32, i32
  }
  func.func @transform_2(%arg0: i32, %arg1: i32) -> (i32, i32, i32) {
    %c0_i32 = arith.constant 0 : i32
    %c0_i32_0 = arith.constant 0 : i32
    %c0_i32_1 = arith.constant 0 : i32
    return %arg0, %c0_i32, %c0_i32_0 : i32, i32, i32
  }
}

</mosaic_0001>

<llo_original>
// kernel: weighted_bce_with_logits_loss.1
$region0: #{weighted_bce_with_logits_loss.1}
  #allocation0 [shape = 'u32[]', space=smem, size = 0x4, offset = 0x4, fixed_abs, tag = 'smem constant byte address 0x4 - core index']
  #allocation1 [shape = 'u32[144,128]{1,0:T(1,128)}', space=vmem, size = 0x12000, scoped, tag = 'internal scratch']
  %s0 = inlined_call_operand.vmem [shape: f32[16,128], index: 0, kind: input, shape index: {}]
  %s1 = inlined_call_operand.vmem [shape: f32[16,128], index: 1, kind: input, shape index: {}]
  %s2 = inlined_call_operand.vmem [shape: f32[1,8,128], index: 2, kind: output, shape index: {}]
  %s3 = sld [smem:[#allocation0]]
  $region30: #{weighted_bce_with_logits_loss.1} parent=0
    _
  %s5 = ssub.s32 1, %s3
  %s6 = scalar_select 0, %s5, %s3
  // Predicated region
  $region2: #{weighted_bce_with_logits_loss.1} parent=0 // pred_check
    _
  $region3: #{weighted_bce_with_logits_loss.1} parent=0 // pred_check_branch
    %8 = sbr.rel (0) target = $region5
  $region4: #{weighted_bce_with_logits_loss.1} parent=0 // pred_region
    %s9 = sadd.s32 0, 0
    %p10 = scmp.lt.s32.totalorder %s9, 0
    %s11 = scalar_select %p10, %s9, 0
    %s12 = smul.u32 2, %s11
    %p13 = scmp.lt.s32.totalorder %s12, 1
    %s14 = scalar_select %p13, %s12, 1
    %s15 = smul.addr %s14, 8
    %s16 = scalar_lea.vmem %s0, %s15
    %s17 = sadd.s32 0, 0
    %p18 = scmp.lt.s32.totalorder %s17, 0
    %s19 = scalar_select %p18, %s17, 0
    %s20 = smul.u32 2, %s19
  $region5: #{weighted_bce_with_logits_loss.1} parent=0 // pred_fallthru
    _
  // Predicated region
  $region6: #{weighted_bce_with_logits_loss.1} parent=0 // pred_check
    _
  $region7: #{weighted_bce_with_logits_loss.1} parent=0 // pred_check_branch
    %22 = sbr.rel (0) target = $region9
  $region8: #{weighted_bce_with_logits_loss.1} parent=0 // pred_region
    %s23 = sadd.s32 0, 0
    %p24 = scmp.lt.s32.totalorder %s23, 0
    %s25 = scalar_select %p24, %s23, 0
    %s26 = smul.u32 2, %s25
    %p27 = scmp.lt.s32.totalorder %s26, 1
    %s28 = scalar_select %p27, %s26, 1
    %s29 = smul.addr %s28, 8
    %s30 = scalar_lea.vmem %s1, %s29
    %s31 = sadd.s32 0, 0
    %p32 = scmp.lt.s32.totalorder %s31, 0
    %s33 = scalar_select %p32, %s31, 0
    %s34 = smul.u32 2, %s33
  $region9: #{weighted_bce_with_logits_loss.1} parent=0 // pred_fallthru
    _
  %s35 = sadd.s32 0, 0
  %p36 = scmp.lt.s32.totalorder %s35, 0
  %s37 = scalar_select %p36, %s35, 0
  %s38 = smul.u32 2, %s37
  %p39 = scmp.lt.s32.totalorder %s38, 1
  %s40 = scalar_select %p39, %s38, 1
  %s41 = smul.addr %s40, 8
  %s42 = scalar_lea.vmem %s0, %s41
  %s43 = sadd.s32 0, 0
  %p44 = scmp.lt.s32.totalorder %s43, 0
  %s45 = scalar_select %p44, %s43, 0
  %s46 = smul.u32 2, %s45
  %p47 = scmp.lt.s32.totalorder %s46, 1
  %s48 = scalar_select %p47, %s46, 1
  %s49 = smul.addr %s48, 8
  %s50 = scalar_lea.vmem %s1, %s49
  %s51 = sadd.s32 0, 0
  %p52 = scmp.lt.s32.totalorder %s51, 0
  %s53 = scalar_select %p52, %s51, 0
  %s54 = smul.u32 2, %s53
  %p55 = scmp.lt.s32.totalorder %s54, 1
  %s56 = scalar_select %p55, %s54, 1
  %s57 = smul.addr %s56, 8
  %s58 = scalar_lea.vmem %s0, %s57
  %s59 = sadd.s32 0, 0
  %p60 = scmp.lt.s32.totalorder %s59, 0
  %s61 = scalar_select %p60, %s59, 0
  %s62 = smul.u32 2, %s61
  %s63 = sadd.s32 0, 0
  %p64 = scmp.lt.s32.totalorder %s63, 0
  %s65 = scalar_select %p64, %s63, 0
  %s66 = smul.u32 2, %s65
  %p67 = scmp.lt.s32.totalorder %s66, 1
  %s68 = scalar_select %p67, %s66, 1
  %s69 = smul.addr %s68, 8
  %s70 = scalar_lea.vmem %s1, %s69
  %s71 = sadd.s32 0, 0
  %p72 = scmp.lt.s32.totalorder %s71, 0
  %s73 = scalar_select %p72, %s71, 0
  %s74 = smul.u32 2, %s73
  %p75 = scmp.eq.s32.totalorder 0, 0
  // Predicated region
  $region10: #{weighted_bce_with_logits_loss.1} parent=0 // pred_check
    %p76 = pneg %p75
  $region11: #{weighted_bce_with_logits_loss.1} parent=0 // pred_check_branch
    %78 = sbr.rel (%p76) target = $region13
  $region12: #{weighted_bce_with_logits_loss.1} parent=0 // pred_region
    %79 = vst [vmem:[%s2] sm:$0xff] 0.0
  $region13: #{weighted_bce_with_logits_loss.1} parent=0 // pred_fallthru
    _
  %s80 = sadd.s32 0, 0
  %s81 = smul.u32 %s80, 16
  %s82 = sadd.s32 %s81, 16
  %p83 = scmp.le.s32.totalorder %s82, 16
  // Predicated region
  $region14: #{weighted_bce_with_logits_loss.1} parent=0 // pred_check
    %p84 = pneg %p83
  $region15: #{weighted_bce_with_logits_loss.1} parent=0 // pred_check_branch
    %86 = sbr.rel (%p84) target = $region17
  $region16: #{weighted_bce_with_logits_loss.1} parent=0 // pred_region
    %v87 = vld [vmem:[%s58] sm:$0xff]
    %v88 = vld [vmem:[%s58 + $0x8] sm:$0xff]
    %v89 = vld [vmem:[%s70] sm:$0xff]
    %v90 = vld [vmem:[%s70 + $0x8] sm:$0xff]
    %v91 = vsub.f32 0.0, %v87
    %v92 = vsub.f32 0.0, %v88
    %v93 = vmax.f32 %v91, 0.0
    %v94 = vmax.f32 %v92, 0.0
    %vm95 = vcmp.ne.f32.partialorder %v91, %v91
    %vm96 = vcmp.ne.f32.partialorder %v92, %v92
    %v97 = vadd.f32 %v91, 0.0
    %v98 = vadd.f32 %v92, 0.0
    %v99 = vand.u32 2147483647, %v91
    %v100 = vand.u32 2147483647, %v92
    %v101 = vsub.f32 0.0, %v99
    %v102 = vsub.f32 0.0, %v100
    %v103 = vmul.f32 %v101, 1.442695
    %v104 = vpow.pop %v103
    %v105 = vmul.f32 %v102, 1.442695
    %v106 = vpow.pop %v105
    %v107 = vadd.f32 %v104, 1.0
    %v108 = vlog2.pop %v107
    %v109 = vmul.f32 %v108, 0.6931472
    %v110 = vmul.f32 -0.5, %v104
    %v111 = vadd.f32 %v110, 1.0
    %v112 = vmul.f32 %v111, %v104
    %v113 = vand.u32 2147483647, %v104
    %vm114 = vcmp.lt.f32.partialorder %v113, 0.0004427343
    %v115 = vsel %vm114, %v112, %v109
    %v116 = vadd.f32 %v106, 1.0
    %v117 = vlog2.pop %v116
    %v118 = vmul.f32 %v117, 0.6931472
    %v119 = vmul.f32 -0.5, %v106
    %v120 = vadd.f32 %v119, 1.0
    %v121 = vmul.f32 %v120, %v106
    %v122 = vand.u32 2147483647, %v106
    %vm123 = vcmp.lt.f32.partialorder %v122, 0.0004427343
    %v124 = vsel %vm123, %v121, %v118
    %v125 = vadd.f32 %v93, %v115
    %v126 = vadd.f32 %v94, %v124
    %v127 = vsel %vm95, %v97, %v125
    %v128 = vsel %vm96, %v98, %v126
    %v129 = vadd.f32 %v127, %v87
    %v130 = vadd.f32 %v128, %v88
    %v131 = vmul.f32 %v127, 4.0
    %v132 = vmul.f32 %v128, 4.0
    %v133 = vsub.f32 %v131, %v87
    %v134 = vsub.f32 %v132, %v88
    %v135 = vmul.f32 %v89, %v133
    %v136 = vmul.f32 %v90, %v134
    %v137 = vadd.f32 %v129, %v135
    %v138 = vadd.f32 %v130, %v136
    %v139 = vld [vmem:[%s2] sm:$0xff]
    %v140 = vadd.f32 %v137, %v138
    %v141 = vadd.f32 %v139, %v140
    %142 = vst [vmem:[%s2] sm:$0xff] %v141
  $region17: #{weighted_bce_with_logits_loss.1} parent=0 // pred_fallthru
    _
  %p143 = scmp.gt.s32.totalorder %s82, 16
  // Predicated region
  $region18: #{weighted_bce_with_logits_loss.1} parent=0 // pred_check
    %p144 = pneg %p143
  $region19: #{weighted_bce_with_logits_loss.1} parent=0 // pred_check_branch
    %146 = sbr.rel (%p144) target = $region21
  $region20: #{weighted_bce_with_logits_loss.1} parent=0 // pred_region
    %v147 = vlaneseq
    %v148 = vshrl.u32 %v147, 7
    %v149 = vadd.s32 %v148, 8
    %v150 = vstv %s81
    %v151 = vadd.s32 %v150, %v148
    %v152 = vadd.s32 %v150, %v149
    %v153 = vlaneseq
    %v154 = vand.u32 %v153, 127
    %vm155 = vcmp.lt.s32.totalorder %v151, 16
    %vm156 = vcmp.lt.s32.totalorder %v152, 16
    %vm157 = vcmp.eq.s32.totalorder %v151, 16
    %vm158 = vcmp.eq.s32.totalorder %v152, 16
    %vm159 = vcmp.lt.s32.totalorder %v154, 0
    %vm160 = vmand %vm157, %vm159
    %vm161 = vmand %vm158, %vm159
    %vm162 = vmor %vm155, %vm160
    %vm163 = vmor %vm156, %vm161
    %v164 = vld [vmem:[%s58] sm:$0xff]
    %v165 = vld [vmem:[%s58 + $0x8] sm:$0xff]
    %v166 = vld [vmem:[%s70] sm:$0xff]
    %v167 = vld [vmem:[%s70 + $0x8] sm:$0xff]
    %v168 = vsub.f32 0.0, %v164
    %v169 = vsub.f32 0.0, %v165
    %v170 = vmax.f32 %v168, 0.0
    %v171 = vmax.f32 %v169, 0.0
    %vm172 = vcmp.ne.f32.partialorder %v168, %v168
    %vm173 = vcmp.ne.f32.partialorder %v169, %v169
    %v174 = vadd.f32 %v168, 0.0
    %v175 = vadd.f32 %v169, 0.0
    %v176 = vand.u32 2147483647, %v168
    %v177 = vand.u32 2147483647, %v169
    %v178 = vsub.f32 0.0, %v176
    %v179 = vsub.f32 0.0, %v177
    %v180 = vmul.f32 %v178, 1.442695
    %v181 = vpow.pop %v180
    %v182 = vmul.f32 %v179, 1.442695
    %v183 = vpow.pop %v182
    %v184 = vadd.f32 %v181, 1.0
    %v185 = vlog2.pop %v184
    %v186 = vmul.f32 %v185, 0.6931472
    %v187 = vmul.f32 -0.5, %v181
    %v188 = vadd.f32 %v187, 1.0
    %v189 = vmul.f32 %v188, %v181
    %v190 = vand.u32 2147483647, %v181
    %vm191 = vcmp.lt.f32.partialorder %v190, 0.0004427343
    %v192 = vsel %vm191, %v189, %v186
    %v193 = vadd.f32 %v183, 1.0
    %v194 = vlog2.pop %v193
    %v195 = vmul.f32 %v194, 0.6931472
    %v196 = vmul.f32 -0.5, %v183
    %v197 = vadd.f32 %v196, 1.0
    %v198 = vmul.f32 %v197, %v183
    %v199 = vand.u32 2147483647, %v183
    %vm200 = vcmp.lt.f32.partialorder %v199, 0.0004427343
    %v201 = vsel %vm200, %v198, %v195
    %v202 = vadd.f32 %v170, %v192
    %v203 = vadd.f32 %v171, %v201
    %v204 = vsel %vm172, %v174, %v202
    %v205 = vsel %vm173, %v175, %v203
    %v206 = vadd.f32 %v204, %v164
    %v207 = vadd.f32 %v205, %v165
    %v208 = vmul.f32 %v204, 4.0
    %v209 = vmul.f32 %v205, 4.0
    %v210 = vsub.f32 %v208, %v164
    %v211 = vsub.f32 %v209, %v165
    %v212 = vmul.f32 %v166, %v210
    %v213 = vmul.f32 %v167, %v211
    %v214 = vadd.f32 %v206, %v212
    %v215 = vadd.f32 %v207, %v213
    %v216 = vsel %vm162, %v214, 0.0
    %v217 = vsel %vm163, %v215, 0.0
    %v218 = vld [vmem:[%s2] sm:$0xff]
    %v219 = vadd.f32 %v216, %v217
    %v220 = vadd.f32 %v218, %v219
    %221 = vst [vmem:[%s2] sm:$0xff] %v220
  $region21: #{weighted_bce_with_logits_loss.1} parent=0 // pred_fallthru
    _
  // Predicated region
  $region22: #{weighted_bce_with_logits_loss.1} parent=0 // pred_check
    _
  $region23: #{weighted_bce_with_logits_loss.1} parent=0 // pred_check_branch
    %223 = sbr.rel (0) target = $region25
  $region24: #{weighted_bce_with_logits_loss.1} parent=0 // pred_region
    _
  $region25: #{weighted_bce_with_logits_loss.1} parent=0 // pred_fallthru
    _
  // Predicated region
  $region26: #{weighted_bce_with_logits_loss.1} parent=0 // pred_check
    _
  $region27: #{weighted_bce_with_logits_loss.1} parent=0 // pred_check_branch
    %225 = sbr.rel (0) target = $region29
  $region28: #{weighted_bce_with_logits_loss.1} parent=0 // pred_region
    _
  $region29: #{weighted_bce_with_logits_loss.1} parent=0 // pred_fallthru
    _

</llo_original>
